<compile_context>
chip_gen: v6e
topology: v6e:2x2x1
jax: 0.10.0
libtpu: 0.0.40
codegen_flags: <defaults>
</compile_context>

<pallas_src>
import functools

import jax
import jax.numpy as jnp
import numpy as np
from jax.experimental import pallas as pl
from jax.experimental.pallas import tpu as pltpu

_LOG2 = float(np.log(2.0))
_LANE = 128

# Cache: does this jax install accept pipeline_mode=pl.Buffered(1) on resident operands?
_SINGLE_BUFFER_WEIGHTS = {"ok": None}


def _round_up(x, m):
    return ((x + m - 1) // m) * m


def _cdiv(a, b):
    return (a + b - 1) // b


def _softplus(x):
    # Numerically stable softplus: max(x,0) + log1p(exp(-|x|)). One exp + one log1p (EUP).
    return jnp.maximum(x, 0.0) + jnp.log1p(jnp.exp(-jnp.abs(x)))


# -----------------------------------------------------------------------------------------
# Kernels
# -----------------------------------------------------------------------------------------

def _fused_mlp_kernel(x_ref, *refs):
    """Whole MLP for one batch tile. refs = (w0, b0, w1, b1, ..., wL, bL, out).

    Weights are bf16 (MXU-native), biases/activations f32 (v5e-safe VPU/EUP math).
    The carlosPlus affine is pre-folded into the *next* layer's W/b on the host, so each
    layer only needs a bare softplus; the affine is applied once on the final output.
    """
    out_ref = refs[-1]
    param_refs = refs[:-1]
    n_linear = len(param_refs) // 2

    h = x_ref[...]                                      # f32 [tb, in_p]
    for i in range(n_linear):
        w = param_refs[2 * i][...]                      # bf16 [in_p, out_p]
        b = param_refs[2 * i + 1][...]                  # f32  [1, out_p]
        y = jnp.dot(h.astype(jnp.bfloat16), w, preferred_element_type=jnp.float32) + b
        h = _softplus(y)
    out_ref[...] = (2.0 * h - 2.0 * _LOG2).astype(out_ref.dtype)
    # TODO(synk): on v6e/v7x the transcendentals could optionally run on bf16 inputs
    # (bf16 EUP) if profiling shows the EUP slot saturating; kept f32 for accuracy/v5e.


def _layer_kernel(x_ref, w_ref, b_ref, o_ref, acc_ref, *, is_final):
    """One K/N-tiled Linear (+ softplus) layer — fallback when params don't fit VMEM."""
    k = pl.program_id(2)

    @pl.when(k == 0)
    def _():
        acc_ref[...] = jnp.zeros_like(acc_ref)

    acc_ref[...] += jnp.dot(x_ref[...].astype(jnp.bfloat16), w_ref[...],
                            preferred_element_type=jnp.float32)

    @pl.when(k == pl.num_programs(2) - 1)
    def _():
        y = acc_ref[...] + b_ref[...]
        s = _softplus(y)
        if is_final:
            s = 2.0 * s - 2.0 * _LOG2
        o_ref[...] = s.astype(o_ref.dtype)


# -----------------------------------------------------------------------------------------
# Parameter construction / one-time preparation (out of the hot path)
# -----------------------------------------------------------------------------------------

def nl3ize_init_params(key, n_inputs, n_outputs, n_layers, n_units):
    """normal(std=sqrt(1/in_features)) weights, zero bias — matches init_weights."""
    if n_units < min(n_inputs, n_outputs):
        raise RuntimeError('nUnits must be >= min(nInputs, nOutputs)')
    if n_layers < 1:
        raise RuntimeError('nLayers must be >= 1')
    dims = [n_inputs] + [n_units] * n_layers + [n_outputs]
    params = []
    for i in range(len(dims) - 1):
        fan_in, fan_out = dims[i], dims[i + 1]
        key, sub = jax.random.split(key)
        w = jax.random.normal(sub, (fan_in, fan_out), jnp.float32) * np.sqrt(1.0 / fan_in)
        b = jnp.zeros((1, fan_out), jnp.float32)
        params.append((w, b))
    return params


def nl3ize_prepare_params(params):
    """Fold the carlosPlus affine into the next layer, lane-pad to multiples of 128 and
    cast weights to bf16. Done once, so the per-call forward does no parameter work."""
    dims = [int(params[0][0].shape[0])] + [int(w.shape[1]) for w, _ in params]
    pdims = [_round_up(d, _LANE) for d in dims]

    flat = []
    for li, (w, b) in enumerate(params):
        w = jnp.asarray(w, jnp.float32)
        b = jnp.reshape(jnp.asarray(b, jnp.float32), (1, -1))
        if li > 0:
            # Previous layer emits s = softplus(y); the true input is h = 2*s - 2*log2.
            # Fold:  h @ W + b  ==  s @ (2W) + (b - 2*log2 * colsum(W))
            b = b - (2.0 * _LOG2) * jnp.sum(w, axis=0, keepdims=True)
            w = 2.0 * w
        pw = jnp.pad(w, ((0, pdims[li] - dims[li]), (0, pdims[li + 1] - dims[li + 1])))
        pb = jnp.pad(b, ((0, 0), (0, pdims[li + 1] - dims[li + 1])))
        flat += [pw.astype(jnp.bfloat16), pb]           # bf16 weights, f32 biases

    flat = [jax.device_put(a) for a in flat]
    return {"flat": tuple(flat), "dims": tuple(dims), "pdims": tuple(pdims)}


# -----------------------------------------------------------------------------------------
# VMEM budgeting / tiling heuristics
# -----------------------------------------------------------------------------------------

def _vmem_capacity_bytes():
    try:
        cap = int(getattr(pltpu.get_tpu_info(), "vmem_capacity_bytes", 0))
        if cap > 0:
            return cap
    except Exception:
        pass
    return 64 * 1024 * 1024     # conservative default (v7x per-TensorCore VMEM)


def _resident_param_bytes(flat):
    return sum(int(np.prod(a.shape)) * a.dtype.itemsize for a in flat)


def _fused_vmem_need(tb, pdims, resident_bytes):
    io = 2 * tb * (pdims[0] + pdims[-1]) * 4        # double-buffered x / out tiles
    work = 4 * tb * max(pdims) * 4                  # live f32 intermediates + headroom
    return resident_bytes + io + work


def _pick_batch_tile(batch, pdims, resident_bytes, vmem_budget):
    if batch <= 128:
        return _round_up(max(batch, 1), 8)
    for tb in (1024, 512, 256, 128):
        if tb > batch:
            continue
        if batch >= 256 and _cdiv(batch, tb) < 2:
            continue                                # keep both v7x TensorCores busy
        if _fused_vmem_need(tb, pdims, resident_bytes) * 5 // 4 <= vmem_budget:
            return tb
    return 128


def _largest_aligned_tile(dim, candidates=(512, 256, 128)):
    for c in candidates:
        if dim >= c and dim % c == 0:
            return c
    return dim


# -----------------------------------------------------------------------------------------
# Forward paths
# -----------------------------------------------------------------------------------------

def _run_fused(xp, flat, dims, pdims, tb, batch):
    n_linear = len(flat) // 2
    pb = xp.shape[0]
    grid = (pb // tb,)

    vmem_budget = (_vmem_capacity_bytes() * 3) // 4
    resident = _resident_param_bytes(flat)
    need = _fused_vmem_need(tb, pdims, resident)
    vmem_limit = int(min(vmem_budget, max(2 * need, 16 * 1024 * 1024)))

    # Advisory cost estimate from the TRUE (unpadded) dims.
    cost = pl.CostEstimate(
        flops=2 * batch * sum(dims[i] * dims[i + 1] for i in range(n_linear)),
        transcendentals=2 * batch * sum(dims[1:]),
        bytes_accessed=int(sum(dims[i] * dims[i + 1] * 2 + dims[i + 1] * 4
                               for i in range(n_linear))
                           + batch * (dims[0] + dims[-1]) * 4))

    x_buffers = 3 if pdims[0] >= 1024 else 2    # deeper x pipelining only when the DMA is big

    def build(advanced_buffering):
        if advanced_buffering and x_buffers != 2:
            x_spec = pl.BlockSpec((tb, pdims[0]), lambda i: (i, 0),
                                  pipeline_mode=pl.Buffered(x_buffers))
        else:
            x_spec = pl.BlockSpec((tb, pdims[0]), lambda i: (i, 0))
        wkw = {"pipeline_mode": pl.Buffered(1)} if advanced_buffering else {}
        in_specs = [x_spec]
        for li in range(n_linear):
            in_specs.append(pl.BlockSpec((pdims[li], pdims[li + 1]),
                                         lambda i: (0, 0), **wkw))      # resident W
            in_specs.append(pl.BlockSpec((1, pdims[li + 1]),
                                         lambda i: (0, 0), **wkw))      # resident b
        out_spec = pl.BlockSpec((tb, pdims[-1]), lambda i: (i, 0))
        return pl.pallas_call(
            _fused_mlp_kernel,
            out_shape=jax.ShapeDtypeStruct((pb, pdims[-1]), jnp.float32),
            grid=grid,
            in_specs=in_specs,
            out_specs=out_spec,
            compiler_params=pltpu.CompilerParams(
                dimension_semantics=("parallel",),
                vmem_limit_bytes=vmem_limit),
            cost_estimate=cost,
        )

    cached = _SINGLE_BUFFER_WEIGHTS["ok"]
    attempts = (True, False) if cached is None else (cached,)
    err = None
    for single in attempts:
        try:
            out = jax.block_until_ready(build(single)(xp, *flat))
            _SINGLE_BUFFER_WEIGHTS["ok"] = single
            return out
        except Exception as e:          # fall back to default double buffering
            err = e
    raise err


def _run_layerwise(xp, flat, dims, pdims, tm, batch):
    """Per-layer K/N-tiled matmul+softplus (P3 accumulator pattern): graceful fallback when
    the fully-resident fused kernel would not fit the VMEM budget (e.g. huge nUnits on v7x)."""
    n_linear = len(flat) // 2
    vmem_budget = (_vmem_capacity_bytes() * 3) // 4
    h = xp
    for li in range(n_linear):
        w_p, b_p = flat[2 * li], flat[2 * li + 1]
        is_final = li == n_linear - 1
        mp, kp = h.shape
        np_ = w_p.shape[1]
        tn = _largest_aligned_tile(np_)
        tk = _largest_aligned_tile(kp)
        grid = (mp // tm, np_ // tn, kp // tk)
        need = 2 * (tm * tk * 4 + tk * tn * 2 + tn * 4 + tm * tn * 4) + 4 * tm * tn * 4
        vmem_limit = int(min(vmem_budget, max(2 * need, 16 * 1024 * 1024)))
        cost = pl.CostEstimate(
            flops=2 * batch * dims[li] * dims[li + 1],
            transcendentals=2 * batch * dims[li + 1],
            bytes_accessed=int(batch * dims[li] * 4 + dims[li] * dims[li + 1] * 2
                               + batch * dims[li + 1] * 4))
        h = pl.pallas_call(
            functools.partial(_layer_kernel, is_final=is_final),
            out_shape=jax.ShapeDtypeStruct((mp, np_), jnp.float32),
            grid=grid,
            in_specs=[pl.BlockSpec((tm, tk), lambda i, j, k: (i, k)),
                      pl.BlockSpec((tk, tn), lambda i, j, k: (k, j)),
                      pl.BlockSpec((1, tn), lambda i, j, k: (0, j))],
            out_specs=pl.BlockSpec((tm, tn), lambda i, j, k: (i, j)),
            scratch_shapes=[pltpu.VMEM((tm, tn), jnp.float32)],
            compiler_params=pltpu.CompilerParams(
                dimension_semantics=("parallel", "parallel", "arbitrary"),
                vmem_limit_bytes=vmem_limit),
            cost_estimate=cost,
        )(h, w_p, b_p)
    return h


def nl3ize_forward(x, prepped, *, force_layerwise=False):
    """x: [batch, nInputs]; prepped: nl3ize_prepare_params(params) -> [batch, nOutputs] f32."""
    flat, dims, pdims = prepped["flat"], prepped["dims"], prepped["pdims"]
    batch, n_in = x.shape
    if n_in != dims[0]:
        raise ValueError(f"expected {dims[0]} input features, got {n_in}")
    n_out = dims[-1]

    vmem_budget = (_vmem_capacity_bytes() * 3) // 4
    resident = _resident_param_bytes(flat)
    tb = _pick_batch_tile(batch, pdims, resident, vmem_budget)
    pb = _round_up(batch, tb)

    xp = x.astype(jnp.float32)
    if pb != batch or pdims[0] != n_in:             # skip the pad when already aligned
        xp = jnp.pad(xp, ((0, pb - batch), (0, pdims[0] - n_in)))

    use_fused = (not force_layerwise) and (
        _fused_vmem_need(tb, pdims, resident) * 5 // 4 <= vmem_budget)
    if use_fused:
        out_p = _run_fused(xp, flat, dims, pdims, tb, batch)
    else:
        out_p = _run_layerwise(xp, flat, dims, pdims, tb, batch)
    return out_p[:batch, :n_out]


def _reference_forward(x, params):
    """Pure f32 reference matching the PyTorch module semantics."""
    h = jnp.asarray(x, jnp.float32)
    for w, b in params:
        y = h @ jnp.asarray(w, jnp.float32) + jnp.reshape(jnp.asarray(b, jnp.float32), (1, -1))
        h = 2.0 * (jnp.maximum(y, 0.0) + jnp.log1p(jnp.exp(-jnp.abs(y)))) - 2.0 * _LOG2
    return h


if __name__ == "__main__":
    # Small shapes consistent with the module: nInputs=16, nOutputs=8, nLayers=2, nUnits=32.
    batch, n_inputs, n_outputs, n_layers, n_units = 8, 16, 8, 2, 32

    key = jax.random.PRNGKey(0)
    key, xkey = jax.random.split(key)
    x = jax.random.normal(xkey, (batch, n_inputs), jnp.float32)

    params = nl3ize_init_params(key, n_inputs, n_outputs, n_layers, n_units)
    prepped = nl3ize_prepare_params(params)

    out = jax.block_until_ready(nl3ize_forward(x, prepped))

    ref = _reference_forward(x, params)
    # Tolerance accounts for bf16 MXU operands (weights + matmul-side activations);
    # structural errors (wrong layer order / activation / affine fold) are O(0.3+) here.
    np.testing.assert_allclose(np.asarray(out), np.asarray(ref), rtol=5e-2, atol=5e-2)

    # Also exercise the K/N-tiled per-layer fallback (the path taken when resident weights
    # would exceed the generation-aware VMEM budget, e.g. very large nUnits on v7x).
    out_lw = jax.block_until_ready(nl3ize_forward(x, prepped, force_layerwise=True))
    np.testing.assert_allclose(np.asarray(out_lw), np.asarray(ref), rtol=5e-2, atol=5e-2)

    print("KERNEL_OK")
</pallas_src>

<mosaic_0001>
module attributes {stable_mosaic.version = 11 : i64} {
  func.func @_fused_mlp_kernel(%arg0: i32, %arg1: memref<8x128xf32, #tpu.memory_space<vmem>>, %arg2: memref<128x128xbf16, #tpu.memory_space<vmem>>, %arg3: memref<1x128xf32, #tpu.memory_space<vmem>>, %arg4: memref<128x128xbf16, #tpu.memory_space<vmem>>, %arg5: memref<1x128xf32, #tpu.memory_space<vmem>>, %arg6: memref<128x128xbf16, #tpu.memory_space<vmem>>, %arg7: memref<1x128xf32, #tpu.memory_space<vmem>>, %arg8: memref<8x128xf32, #tpu.memory_space<vmem>>) attributes {dimension_semantics = [#tpu.dimension_semantics<parallel>], iteration_bounds = array<i64: 1>, scalar_prefetch = 0 : i64, scratch_operands = 0 : i64, tpu.core_type = #tpu.core_type<tc>, window_params = [{transform_indices = @transform_0, window_bounds = array<i64: 8, 128>}, {pipeline_mode = #tpu.pipeline_mode<synchronous>, transform_indices = @transform_1, window_bounds = array<i64: 128, 128>}, {pipeline_mode = #tpu.pipeline_mode<synchronous>, transform_indices = @transform_2, window_bounds = array<i64: 1, 128>}, {pipeline_mode = #tpu.pipeline_mode<synchronous>, transform_indices = @transform_3, window_bounds = array<i64: 128, 128>}, {pipeline_mode = #tpu.pipeline_mode<synchronous>, transform_indices = @transform_4, window_bounds = array<i64: 1, 128>}, {pipeline_mode = #tpu.pipeline_mode<synchronous>, transform_indices = @transform_5, window_bounds = array<i64: 128, 128>}, {pipeline_mode = #tpu.pipeline_mode<synchronous>, transform_indices = @transform_6, window_bounds = array<i64: 1, 128>}, {transform_indices = @transform_7, window_bounds = array<i64: 8, 128>}]} {
    %c0 = arith.constant 0 : index
    %c0_0 = arith.constant 0 : index
    %0 = vector.load %arg1[%c0, %c0_0] : memref<8x128xf32, #tpu.memory_space<vmem>>, vector<8x128xf32>
    %c0_1 = arith.constant 0 : index
    %c0_2 = arith.constant 0 : index
    %1 = vector.load %arg2[%c0_1, %c0_2] : memref<128x128xbf16, #tpu.memory_space<vmem>>, vector<128x128xbf16>
    %c0_3 = arith.constant 0 : index
    %c0_4 = arith.constant 0 : index
    %2 = vector.load %arg3[%c0_3, %c0_4] : memref<1x128xf32, #tpu.memory_space<vmem>>, vector<1x128xf32>
    %3 = arith.truncf %0 : vector<8x128xf32> to vector<8x128xbf16>
    %cst = arith.constant dense<0.000000e+00> : vector<8x128xf32>
    %4 = tpu.matmul %3, %1, %cst {dimension_numbers = #tpu.dot_dimension_numbers<[1], [0], [0], [1], [0, 0, 1, 1], [], []>} : vector<8x128xbf16>, vector<128x128xbf16>, vector<8x128xf32> -> vector<8x128xf32>
    %5 = vector.broadcast %2 : vector<1x128xf32> to vector<8x128xf32>
    %6 = arith.addf %4, %5 : vector<8x128xf32>
    %cst_5 = arith.constant 0.000000e+00 : f32
    %7 = vector.broadcast %cst_5 : f32 to vector<8x128xf32>
    %8 = arith.maximumf %6, %7 : vector<8x128xf32>
    %9 = math.absf %6 : vector<8x128xf32>
    %cst_6 = arith.constant 0.000000e+00 : f32
    %10 = vector.broadcast %cst_6 : f32 to vector<8x128xf32>
    %11 = arith.subf %10, %9 : vector<8x128xf32>
    %12 = math.exp %11 : vector<8x128xf32>
    %13 = math.log1p %12 : vector<8x128xf32>
    %14 = arith.addf %8, %13 : vector<8x128xf32>
    %c0_7 = arith.constant 0 : index
    %c0_8 = arith.constant 0 : index
    %15 = vector.load %arg4[%c0_7, %c0_8] : memref<128x128xbf16, #tpu.memory_space<vmem>>, vector<128x128xbf16>
    %c0_9 = arith.constant 0 : index
    %c0_10 = arith.constant 0 : index
    %16 = vector.load %arg5[%c0_9, %c0_10] : memref<1x128xf32, #tpu.memory_space<vmem>>, vector<1x128xf32>
    %17 = arith.truncf %14 : vector<8x128xf32> to vector<8x128xbf16>
    %cst_11 = arith.constant dense<0.000000e+00> : vector<8x128xf32>
    %18 = tpu.matmul %17, %15, %cst_11 {dimension_numbers = #tpu.dot_dimension_numbers<[1], [0], [0], [1], [0, 0, 1, 1], [], []>} : vector<8x128xbf16>, vector<128x128xbf16>, vector<8x128xf32> -> vector<8x128xf32>
    %19 = vector.broadcast %16 : vector<1x128xf32> to vector<8x128xf32>
    %20 = arith.addf %18, %19 : vector<8x128xf32>
    %cst_12 = arith.constant 0.000000e+00 : f32
    %21 = vector.broadcast %cst_12 : f32 to vector<8x128xf32>
    %22 = arith.maximumf %20, %21 : vector<8x128xf32>
    %23 = math.absf %20 : vector<8x128xf32>
    %cst_13 = arith.constant 0.000000e+00 : f32
    %24 = vector.broadcast %cst_13 : f32 to vector<8x128xf32>
    %25 = arith.subf %24, %23 : vector<8x128xf32>
    %26 = math.exp %25 : vector<8x128xf32>
    %27 = math.log1p %26 : vector<8x128xf32>
    %28 = arith.addf %22, %27 : vector<8x128xf32>
    %c0_14 = arith.constant 0 : index
    %c0_15 = arith.constant 0 : index
    %29 = vector.load %arg6[%c0_14, %c0_15] : memref<128x128xbf16, #tpu.memory_space<vmem>>, vector<128x128xbf16>
    %c0_16 = arith.constant 0 : index
    %c0_17 = arith.constant 0 : index
    %30 = vector.load %arg7[%c0_16, %c0_17] : memref<1x128xf32, #tpu.memory_space<vmem>>, vector<1x128xf32>
    %31 = arith.truncf %28 : vector<8x128xf32> to vector<8x128xbf16>
    %cst_18 = arith.constant dense<0.000000e+00> : vector<8x128xf32>
    %32 = tpu.matmul %31, %29, %cst_18 {dimension_numbers = #tpu.dot_dimension_numbers<[1], [0], [0], [1], [0, 0, 1, 1], [], []>} : vector<8x128xbf16>, vector<128x128xbf16>, vector<8x128xf32> -> vector<8x128xf32>
    %33 = vector.broadcast %30 : vector<1x128xf32> to vector<8x128xf32>
    %34 = arith.addf %32, %33 : vector<8x128xf32>
    %cst_19 = arith.constant 0.000000e+00 : f32
    %35 = vector.broadcast %cst_19 : f32 to vector<8x128xf32>
    %36 = arith.maximumf %34, %35 : vector<8x128xf32>
    %37 = math.absf %34 : vector<8x128xf32>
    %cst_20 = arith.constant 0.000000e+00 : f32
    %38 = vector.broadcast %cst_20 : f32 to vector<8x128xf32>
    %39 = arith.subf %38, %37 : vector<8x128xf32>
    %40 = math.exp %39 : vector<8x128xf32>
    %41 = math.log1p %40 : vector<8x128xf32>
    %42 = arith.addf %36, %41 : vector<8x128xf32>
    %cst_21 = arith.constant 2.000000e+00 : f32
    %43 = vector.broadcast %cst_21 : f32 to vector<8x128xf32>
    %44 = arith.mulf %43, %42 : vector<8x128xf32>
    %cst_22 = arith.constant 1.38629436 : f32
    %45 = vector.broadcast %cst_22 : f32 to vector<8x128xf32>
    %46 = arith.subf %44, %45 : vector<8x128xf32>
    %c0_23 = arith.constant 0 : index
    %c0_24 = arith.constant 0 : index
    %47 = vector.load %arg8[%c0_23, %c0_24] : memref<8x128xf32, #tpu.memory_space<vmem>>, vector<8x128xf32>
    tpu.vector_store %arg8[%c0_23, %c0_24], %46 {strides = array<i32>} : memref<8x128xf32, #tpu.memory_space<vmem>>, vector<8x128xf32>,
    return
  }
  func.func @transform_0(%arg0: i32) -> (i32, i32) {
    %c0_i32 = arith.constant 0 : i32
    %c0_i32_0 = arith.constant 0 : i32
    return %arg0, %c0_i32 : i32, i32
  }
  func.func @transform_1(%arg0: i32) -> (i32, i32) {
    %c0_i32 = arith.constant 0 : i32
    %c0_i32_0 = arith.constant 0 : i32
    %c0_i32_1 = arith.constant 0 : i32
    return %c0_i32, %c0_i32_0 : i32, i32
  }
  func.func @transform_2(%arg0: i32) -> (i32, i32) {
    %c0_i32 = arith.constant 0 : i32
    %c0_i32_0 = arith.constant 0 : i32
    %c0_i32_1 = arith.constant 0 : i32
    return %c0_i32, %c0_i32_0 : i32, i32
  }
  func.func @transform_3(%arg0: i32) -> (i32, i32) {
    %c0_i32 = arith.constant 0 : i32
    %c0_i32_0 = arith.constant 0 : i32
    %c0_i32_1 = arith.constant 0 : i32
    return %c0_i32, %c0_i32_0 : i32, i32
  }
  func.func @transform_4(%arg0: i32) -> (i32, i32) {
    %c0_i32 = arith.constant 0 : i32
    %c0_i32_0 = arith.constant 0 : i32
    %c0_i32_1 = arith.constant 0 : i32
    return %c0_i32, %c0_i32_0 : i32, i32
  }
  func.func @transform_5(%arg0: i32) -> (i32, i32) {
    %c0_i32 = arith.constant 0 : i32
    %c0_i32_0 = arith.constant 0 : i32
    %c0_i32_1 = arith.constant 0 : i32
    return %c0_i32, %c0_i32_0 : i32, i32
  }
  func.func @transform_6(%arg0: i32) -> (i32, i32) {
    %c0_i32 = arith.constant 0 : i32
    %c0_i32_0 = arith.constant 0 : i32
    %c0_i32_1 = arith.constant 0 : i32
    return %c0_i32, %c0_i32_0 : i32, i32
  }
  func.func @transform_7(%arg0: i32) -> (i32, i32) {
    %c0_i32 = arith.constant 0 : i32
    %c0_i32_0 = arith.constant 0 : i32
    return %arg0, %c0_i32 : i32, i32
  }
}

module attributes {stable_mosaic.version = 11 : i64} {
  func.func @_fused_mlp_kernel(%arg0: i32, %arg1: memref<8x128xf32, #tpu.memory_space<vmem>>, %arg2: memref<128x128xbf16, #tpu.memory_space<vmem>>, %arg3: memref<1x128xf32, #tpu.memory_space<vmem>>, %arg4: memref<128x128xbf16, #tpu.memory_space<vmem>>, %arg5: memref<1x128xf32, #tpu.memory_space<vmem>>, %arg6: memref<128x128xbf16, #tpu.memory_space<vmem>>, %arg7: memref<1x128xf32, #tpu.memory_space<vmem>>, %arg8: memref<8x128xf32, #tpu.memory_space<vmem>>) attributes {dimension_semantics = [#tpu.dimension_semantics<parallel>], iteration_bounds = array<i64: 1>, scalar_prefetch = 0 : i64, scratch_operands = 0 : i64, tpu.core_type = #tpu.core_type<tc>, window_params = [{transform_indices = @transform_0, window_bounds = array<i64: 8, 128>}, {pipeline_mode = #tpu.pipeline_mode<synchronous>, transform_indices = @transform_1, window_bounds = array<i64: 128, 128>}, {pipeline_mode = #tpu.pipeline_mode<synchronous>, transform_indices = @transform_2, window_bounds = array<i64: 1, 128>}, {pipeline_mode = #tpu.pipeline_mode<synchronous>, transform_indices = @transform_3, window_bounds = array<i64: 128, 128>}, {pipeline_mode = #tpu.pipeline_mode<synchronous>, transform_indices = @transform_4, window_bounds = array<i64: 1, 128>}, {pipeline_mode = #tpu.pipeline_mode<synchronous>, transform_indices = @transform_5, window_bounds = array<i64: 128, 128>}, {pipeline_mode = #tpu.pipeline_mode<synchronous>, transform_indices = @transform_6, window_bounds = array<i64: 1, 128>}, {transform_indices = @transform_7, window_bounds = array<i64: 8, 128>}]} {
    %c0 = arith.constant 0 : index
    %c0_0 = arith.constant 0 : index
    %0 = vector.load %arg1[%c0, %c0_0] : memref<8x128xf32, #tpu.memory_space<vmem>>, vector<8x128xf32>
    %c0_1 = arith.constant 0 : index
    %c0_2 = arith.constant 0 : index
    %1 = vector.load %arg2[%c0_1, %c0_2] : memref<128x128xbf16, #tpu.memory_space<vmem>>, vector<128x128xbf16>
    %c0_3 = arith.constant 0 : index
    %c0_4 = arith.constant 0 : index
    %2 = vector.load %arg3[%c0_3, %c0_4] : memref<1x128xf32, #tpu.memory_space<vmem>>, vector<1x128xf32>
    %3 = arith.truncf %0 : vector<8x128xf32> to vector<8x128xbf16>
    %cst = arith.constant dense<0.000000e+00> : vector<8x128xf32>
    %4 = tpu.matmul %3, %1, %cst {dimension_numbers = #tpu.dot_dimension_numbers<[1], [0], [0], [1], [0, 0, 1, 1], [], []>} : vector<8x128xbf16>, vector<128x128xbf16>, vector<8x128xf32> -> vector<8x128xf32>
    %5 = vector.broadcast %2 : vector<1x128xf32> to vector<8x128xf32>
    %6 = arith.addf %4, %5 : vector<8x128xf32>
    %cst_5 = arith.constant 0.000000e+00 : f32
    %7 = vector.broadcast %cst_5 : f32 to vector<8x128xf32>
    %8 = arith.maximumf %6, %7 : vector<8x128xf32>
    %9 = math.absf %6 : vector<8x128xf32>
    %cst_6 = arith.constant 0.000000e+00 : f32
    %10 = vector.broadcast %cst_6 : f32 to vector<8x128xf32>
    %11 = arith.subf %10, %9 : vector<8x128xf32>
    %12 = math.exp %11 : vector<8x128xf32>
    %13 = math.log1p %12 : vector<8x128xf32>
    %14 = arith.addf %8, %13 : vector<8x128xf32>
    %c0_7 = arith.constant 0 : index
    %c0_8 = arith.constant 0 : index
    %15 = vector.load %arg4[%c0_7, %c0_8] : memref<128x128xbf16, #tpu.memory_space<vmem>>, vector<128x128xbf16>
    %c0_9 = arith.constant 0 : index
    %c0_10 = arith.constant 0 : index
    %16 = vector.load %arg5[%c0_9, %c0_10] : memref<1x128xf32, #tpu.memory_space<vmem>>, vector<1x128xf32>
    %17 = arith.truncf %14 : vector<8x128xf32> to vector<8x128xbf16>
    %cst_11 = arith.constant dense<0.000000e+00> : vector<8x128xf32>
    %18 = tpu.matmul %17, %15, %cst_11 {dimension_numbers = #tpu.dot_dimension_numbers<[1], [0], [0], [1], [0, 0, 1, 1], [], []>} : vector<8x128xbf16>, vector<128x128xbf16>, vector<8x128xf32> -> vector<8x128xf32>
    %19 = vector.broadcast %16 : vector<1x128xf32> to vector<8x128xf32>
    %20 = arith.addf %18, %19 : vector<8x128xf32>
    %cst_12 = arith.constant 0.000000e+00 : f32
    %21 = vector.broadcast %cst_12 : f32 to vector<8x128xf32>
    %22 = arith.maximumf %20, %21 : vector<8x128xf32>
    %23 = math.absf %20 : vector<8x128xf32>
    %cst_13 = arith.constant 0.000000e+00 : f32
    %24 = vector.broadcast %cst_13 : f32 to vector<8x128xf32>
    %25 = arith.subf %24, %23 : vector<8x128xf32>
    %26 = math.exp %25 : vector<8x128xf32>
    %27 = math.log1p %26 : vector<8x128xf32>
    %28 = arith.addf %22, %27 : vector<8x128xf32>
    %c0_14 = arith.constant 0 : index
    %c0_15 = arith.constant 0 : index
    %29 = vector.load %arg6[%c0_14, %c0_15] : memref<128x128xbf16, #tpu.memory_space<vmem>>, vector<128x128xbf16>
    %c0_16 = arith.constant 0 : index
    %c0_17 = arith.constant 0 : index
    %30 = vector.load %arg7[%c0_16, %c0_17] : memref<1x128xf32, #tpu.memory_space<vmem>>, vector<1x128xf32>
    %31 = arith.truncf %28 : vector<8x128xf32> to vector<8x128xbf16>
    %cst_18 = arith.constant dense<0.000000e+00> : vector<8x128xf32>
    %32 = tpu.matmul %31, %29, %cst_18 {dimension_numbers = #tpu.dot_dimension_numbers<[1], [0], [0], [1], [0, 0, 1, 1], [], []>} : vector<8x128xbf16>, vector<128x128xbf16>, vector<8x128xf32> -> vector<8x128xf32>
    %33 = vector.broadcast %30 : vector<1x128xf32> to vector<8x128xf32>
    %34 = arith.addf %32, %33 : vector<8x128xf32>
    %cst_19 = arith.constant 0.000000e+00 : f32
    %35 = vector.broadcast %cst_19 : f32 to vector<8x128xf32>
    %36 = arith.maximumf %34, %35 : vector<8x128xf32>
    %37 = math.absf %34 : vector<8x128xf32>
    %cst_20 = arith.constant 0.000000e+00 : f32
    %38 = vector.broadcast %cst_20 : f32 to vector<8x128xf32>
    %39 = arith.subf %38, %37 : vector<8x128xf32>
    %40 = math.exp %39 : vector<8x128xf32>
    %41 = math.log1p %40 : vector<8x128xf32>
    %42 = arith.addf %36, %41 : vector<8x128xf32>
    %cst_21 = arith.constant 2.000000e+00 : f32
    %43 = vector.broadcast %cst_21 : f32 to vector<8x128xf32>
    %44 = arith.mulf %43, %42 : vector<8x128xf32>
    %cst_22 = arith.constant 1.38629436 : f32
    %45 = vector.broadcast %cst_22 : f32 to vector<8x128xf32>
    %46 = arith.subf %44, %45 : vector<8x128xf32>
    %c0_23 = arith.constant 0 : index
    %c0_24 = arith.constant 0 : index
    %47 = vector.load %arg8[%c0_23, %c0_24] : memref<8x128xf32, #tpu.memory_space<vmem>>, vector<8x128xf32>
    tpu.vector_store %arg8[%c0_23, %c0_24], %46 {strides = array<i32>} : memref<8x128xf32, #tpu.memory_space<vmem>>, vector<8x128xf32>,
    return
  }
  func.func @transform_0(%arg0: i32) -> (i32, i32) {
    %c0_i32 = arith.constant 0 : i32
    %c0_i32_0 = arith.constant 0 : i32
    return %arg0, %c0_i32 : i32, i32
  }
  func.func @transform_1(%arg0: i32) -> (i32, i32) {
    %c0_i32 = arith.constant 0 : i32
    %c0_i32_0 = arith.constant 0 : i32
    %c0_i32_1 = arith.constant 0 : i32
    return %c0_i32, %c0_i32_0 : i32, i32
  }
  func.func @transform_2(%arg0: i32) -> (i32, i32) {
    %c0_i32 = arith.constant 0 : i32
    %c0_i32_0 = arith.constant 0 : i32
    %c0_i32_1 = arith.constant 0 : i32
    return %c0_i32, %c0_i32_0 : i32, i32
  }
  func.func @transform_3(%arg0: i32) -> (i32, i32) {
    %c0_i32 = arith.constant 0 : i32
    %c0_i32_0 = arith.constant 0 : i32
    %c0_i32_1 = arith.constant 0 : i32
    return %c0_i32, %c0_i32_0 : i32, i32
  }
  func.func @transform_4(%arg0: i32) -> (i32, i32) {
    %c0_i32 = arith.constant 0 : i32
    %c0_i32_0 = arith.constant 0 : i32
    %c0_i32_1 = arith.constant 0 : i32
    return %c0_i32, %c0_i32_0 : i32, i32
  }
  func.func @transform_5(%arg0: i32) -> (i32, i32) {
    %c0_i32 = arith.constant 0 : i32
    %c0_i32_0 = arith.constant 0 : i32
    %c0_i32_1 = arith.constant 0 : i32
    return %c0_i32, %c0_i32_0 : i32, i32
  }
  func.func @transform_6(%arg0: i32) -> (i32, i32) {
    %c0_i32 = arith.constant 0 : i32
    %c0_i32_0 = arith.constant 0 : i32
    %c0_i32_1 = arith.constant 0 : i32
    return %c0_i32, %c0_i32_0 : i32, i32
  }
  func.func @transform_7(%arg0: i32) -> (i32, i32) {
    %c0_i32 = arith.constant 0 : i32
    %c0_i32_0 = arith.constant 0 : i32
    return %arg0, %c0_i32 : i32, i32
  }
}

</mosaic_0001>

<llo_original>
// kernel: tpu_custom_call.1
$region0: #{tpu_custom_call.1}
  #allocation0 [shape = 'u32[]', space=smem, size = 0x4, offset = 0x4, fixed_abs, tag = 'smem constant byte address 0x4 - core index']
  #allocation1 [shape = 'u32[144,128]{1,0:T(1,128)}', space=vmem, size = 0x12000, scoped, tag = 'internal scratch']
  %s0 = inlined_call_operand.hbm [shape: f32[8,128], index: 0, kind: input, shape index: {}]
  %s1 = inlined_call_operand.hbm [shape: bf16[128,128], index: 1, kind: input, shape index: {}]
  %s2 = inlined_call_operand.vmem [shape: f32[1,128], index: 2, kind: input, shape index: {}]
  %s3 = inlined_call_operand.hbm [shape: bf16[128,128], index: 3, kind: input, shape index: {}]
  %s4 = inlined_call_operand.vmem [shape: f32[1,128], index: 4, kind: input, shape index: {}]
  %s5 = inlined_call_operand.hbm [shape: bf16[128,128], index: 5, kind: input, shape index: {}]
  %s6 = inlined_call_operand.vmem [shape: f32[1,128], index: 6, kind: input, shape index: {}]
  %s7 = inlined_call_operand.hbm [shape: f32[8,128], index: 7, kind: output, shape index: {}]
  %s8 = sld [smem:[#allocation0]]
  $region54: #{tpu_custom_call.1} parent=0
    _
  %s10 = ssub.s32 1, %s8
  %s11 = scalar_select 0, %s10, %s8
  $region1: #{tpu_custom_call.1} parent=0
    #allocation2 [shape = 'u8[4096]{0}', space=vmem, size = 0x1000, scoped, tag = 'input window, operand 0, single buffered']
    #allocation3 [shape = 's32[1]{0}', space=sflag, size = 0x4, scoped, tag = 'scoped memory for tpu_custom_call.1']
    #allocation4 [shape = 's32[1]{0}', space=sflag, size = 0x4, scoped, tag = 'scoped memory for tpu_custom_call.1']
    #allocation5 [shape = 'u8[32768]{0}', space=vmem, size = 0x8000, scoped, tag = 'input window, operand 1, single buffered']
    #allocation6 [shape = 's32[1]{0}', space=sflag, size = 0x4, scoped, tag = 'scoped memory for tpu_custom_call.1']
    #allocation7 [shape = 'u8[32768]{0}', space=vmem, size = 0x8000, scoped, tag = 'input window, operand 3, single buffered']
    #allocation8 [shape = 'u8[32768]{0}', space=vmem, size = 0x8000, scoped, tag = 'input window, operand 5, single buffered']
    #allocation9 [shape = 's32[1]{0}', space=sflag, size = 0x4, scoped, tag = 'scoped memory for tpu_custom_call.1']
    #allocation10 [shape = 'u8[4096]{0}', space=vmem, size = 0x1000, scoped, tag = 'output window, operand 0, single buffered']
    %12 = vsyncpa [#allocation3], 0
    %13 = vsyncpa [#allocation6], 0
    %14 = vsyncpa [#allocation9], 0
    %15 = vsyncpa [#allocation4], 0
    // Predicated region
    $region2: #{tpu_custom_call.1} parent=1 // pred_check
      _
    $region3: #{tpu_custom_call.1} parent=1 // pred_check_branch
      %17 = sbr.rel (0) target = $region5
    $region4: #{tpu_custom_call.1} parent=1 // pred_region
      %s19 = ssub.s32 128, 128
      %20 = vsyncadd [#allocation3], %s19
      %s22 = sshll.u32 [#allocation2], 4
      %s23 = int_to_ptr.vmem [resolvable:$true] %s22
      %25 = dma.hbm_to_vmem [thread:$0]  %s0, 128, %s23, [#allocation3]
    $region5: #{tpu_custom_call.1} parent=1 // pred_fallthru
      _
    // Predicated region
    $region6: #{tpu_custom_call.1} parent=1 // pred_check
      _
    $region7: #{tpu_custom_call.1} parent=1 // pred_check_branch
      %27 = sbr.rel (0) target = $region9
    $region8: #{tpu_custom_call.1} parent=1 // pred_region
      %s29 = ssub.s32 1024, 1024
      %30 = vsyncadd [#allocation6], %s29
      %s31 = sshll.u32 [#allocation5], 4
      %s32 = int_to_ptr.vmem [resolvable:$true] %s31
      %37 = dma.hbm_to_vmem [thread:$0]  %s1, 1024, %s32, [#allocation6], 64, 64, 4
    $region9: #{tpu_custom_call.1} parent=1 // pred_fallthru
      _
    // Predicated region
    $region10: #{tpu_custom_call.1} parent=1 // pred_check
      _
    $region11: #{tpu_custom_call.1} parent=1 // pred_check_branch
      %39 = sbr.rel (0) target = $region13
    $region12: #{tpu_custom_call.1} parent=1 // pred_region
      _
    $region13: #{tpu_custom_call.1} parent=1 // pred_fallthru
      _
    // Predicated region
    $region14: #{tpu_custom_call.1} parent=1 // pred_check
      _
    $region15: #{tpu_custom_call.1} parent=1 // pred_check_branch
      %41 = sbr.rel (0) target = $region17
    $region16: #{tpu_custom_call.1} parent=1 // pred_region
      %s43 = ssub.s32 1024, 1024
      %44 = vsyncadd [#allocation6], %s43
      %s45 = sshll.u32 [#allocation7], 4
      %s46 = int_to_ptr.vmem [resolvable:$true] %s45
      %51 = dma.hbm_to_vmem [thread:$0]  %s3, 1024, %s46, [#allocation6], 64, 64, 4
    $region17: #{tpu_custom_call.1} parent=1 // pred_fallthru
      _
    // Predicated region
    $region18: #{tpu_custom_call.1} parent=1 // pred_check
      _
    $region19: #{tpu_custom_call.1} parent=1 // pred_check_branch
      %53 = sbr.rel (0) target = $region21
    $region20: #{tpu_custom_call.1} parent=1 // pred_region
      _
    $region21: #{tpu_custom_call.1} parent=1 // pred_fallthru
      _
    // Predicated region
    $region22: #{tpu_custom_call.1} parent=1 // pred_check
      _
    $region23: #{tpu_custom_call.1} parent=1 // pred_check_branch
      %55 = sbr.rel (0) target = $region25
    $region24: #{tpu_custom_call.1} parent=1 // pred_region
      %s57 = ssub.s32 1024, 1024
      %58 = vsyncadd [#allocation9], %s57
      %s59 = sshll.u32 [#allocation8], 4
      %s60 = int_to_ptr.vmem [resolvable:$true] %s59
      %65 = dma.hbm_to_vmem [thread:$0]  %s5, 1024, %s60, [#allocation9], 64, 64, 4
    $region25: #{tpu_custom_call.1} parent=1 // pred_fallthru
      _
    // Predicated region
    $region26: #{tpu_custom_call.1} parent=1 // pred_check
      _
    $region27: #{tpu_custom_call.1} parent=1 // pred_check_branch
      %67 = sbr.rel (0) target = $region29
    $region28: #{tpu_custom_call.1} parent=1 // pred_region
      _
    $region29: #{tpu_custom_call.1} parent=1 // pred_fallthru
      _
    // Predicated region
    $region30: #{tpu_custom_call.1} parent=1 // pred_check
      _
    $region31: #{tpu_custom_call.1} parent=1 // pred_check_branch
      %69 = sbr.rel (0) target = $region33
    $region32: #{tpu_custom_call.1} parent=1 // pred_region
      %70 = dma.done [#allocation3], 128
    $region33: #{tpu_custom_call.1} parent=1 // pred_fallthru
      _
    // Predicated region
    $region34: #{tpu_custom_call.1} parent=1 // pred_check
      _
    $region35: #{tpu_custom_call.1} parent=1 // pred_check_branch
      %72 = sbr.rel (0) target = $region37
    $region36: #{tpu_custom_call.1} parent=1 // pred_region
      %73 = dma.done [#allocation6], 1024
    $region37: #{tpu_custom_call.1} parent=1 // pred_fallthru
      _
    // Predicated region
    $region38: #{tpu_custom_call.1} parent=1 // pred_check
      _
    $region39: #{tpu_custom_call.1} parent=1 // pred_check_branch
      %75 = sbr.rel (0) target = $region41
    $region40: #{tpu_custom_call.1} parent=1 // pred_region
      %76 = dma.done [#allocation6], 1024
    $region41: #{tpu_custom_call.1} parent=1 // pred_fallthru
      _
    // Predicated region
    $region42: #{tpu_custom_call.1} parent=1 // pred_check
      _
    $region43: #{tpu_custom_call.1} parent=1 // pred_check_branch
      %78 = sbr.rel (0) target = $region45
    $region44: #{tpu_custom_call.1} parent=1 // pred_region
      %79 = dma.done [#allocation9], 1024
    $region45: #{tpu_custom_call.1} parent=1 // pred_fallthru
      _
    %v81 = vld [vmem:[#allocation2] sm:$0xff]
    %v82 = vld [vmem:[#allocation5] sm:$0xf]
    %v83 = vld [vmem:[#allocation5 + $0x4] sm:$0xf]
    %v84 = vld [vmem:[#allocation5 + $0x8] sm:$0xf]
    %v85 = vld [vmem:[#allocation5 + $0xc] sm:$0xf]
    %v86 = vld [vmem:[#allocation5 + $0x10] sm:$0xf]
    %v87 = vld [vmem:[#allocation5 + $0x14] sm:$0xf]
    %v88 = vld [vmem:[#allocation5 + $0x18] sm:$0xf]
    %v89 = vld [vmem:[#allocation5 + $0x1c] sm:$0xf]
    %v90 = vld [vmem:[#allocation5 + $0x20] sm:$0xf]
    %v91 = vld [vmem:[#allocation5 + $0x24] sm:$0xf]
    %v92 = vld [vmem:[#allocation5 + $0x28] sm:$0xf]
    %v93 = vld [vmem:[#allocation5 + $0x2c] sm:$0xf]
    %v94 = vld [vmem:[#allocation5 + $0x30] sm:$0xf]
    %v95 = vld [vmem:[#allocation5 + $0x34] sm:$0xf]
    %v96 = vld [vmem:[#allocation5 + $0x38] sm:$0xf]
    %v97 = vld [vmem:[#allocation5 + $0x3c] sm:$0xf]
    %v98 = vld [vmem:[%s2] sm:$0x1]
    %v99 = vpack.c.bf16 %v81, %v81
    %v101 = vlaneseq
    %v102 = vshrl.u32 %v101, 7
    %v103 = vsub.s32 0, %v102
    %v104 = vrot.slane %v98, %v103
    %v122 = vunpack.c.l.b16 %v82
    %v123 = vunpack.c.l.b16 %v83
    %v124 = vunpack.c.l.b16 %v84
    %v125 = vunpack.c.l.b16 %v85
    %v126 = vunpack.c.l.b16 %v86
    %v127 = vunpack.c.l.b16 %v87
    %v128 = vunpack.c.l.b16 %v88
    %v129 = vunpack.c.l.b16 %v89
    %v130 = vunpack.c.l.b16 %v90
    %v131 = vunpack.c.l.b16 %v91
    %v132 = vunpack.c.l.b16 %v92
    %v133 = vunpack.c.l.b16 %v93
    %v134 = vunpack.c.l.b16 %v94
    %v135 = vunpack.c.l.b16 %v95
    %v136 = vunpack.c.l.b16 %v96
    %v137 = vunpack.c.l.b16 %v97
    %v138 = vpack.c.b16 %v123, %v122
    %v139 = vpack.c.b16 %v125, %v124
    %v140 = vpack.c.b16 %v127, %v126
    %v141 = vpack.c.b16 %v129, %v128
    %v142 = vpack.c.b16 %v131, %v130
    %v143 = vpack.c.b16 %v133, %v132
    %v144 = vpack.c.b16 %v135, %v134
    %v145 = vpack.c.b16 %v137, %v136
    %154 = vmatprep.subr.bf16.mxu0 0
    %155 = vmatpush1.bf16.msra.mxu0 %v145
    %156 = vmatprep.subr.bf16.mxu0 0
    %157 = vmatpush1.bf16.msra.mxu0 %v144
    %158 = vmatprep.subr.bf16.mxu0 0
    %159 = vmatpush1.bf16.msra.mxu0 %v143
    %160 = vmatprep.subr.bf16.mxu0 0
    %161 = vmatpush1.bf16.msra.mxu0 %v142
    %162 = vmatprep.subr.bf16.mxu0 0
    %163 = vmatpush1.bf16.msra.mxu0 %v141
    %164 = vmatprep.subr.bf16.mxu0 0
    %165 = vmatpush1.bf16.msra.mxu0 %v140
    %166 = vmatprep.subr.bf16.mxu0 0
    %167 = vmatpush1.bf16.msra.mxu0 %v139
    %168 = vmatprep.subr.bf16.mxu0 0
    %169 = vmatpush1.bf16.msra.mxu0 %v138
    %170 = vmatprep.subr.bf16.mxu0 0
    %171 = vmatpush2.bf16.msra.mxu0 0
    %172 = vmatprep.subr.bf16.mxu0 0
    %173 = vmatpush2.bf16.msra.mxu0 0
    %174 = vmatprep.subr.bf16.mxu0 0
    %175 = vmatpush2.bf16.msra.mxu0 0
    %176 = vmatprep.subr.bf16.mxu0 0
    %177 = vmatpush2.bf16.msra.mxu0 0
    %178 = vmatprep.subr.bf16.mxu0 0
    %179 = vmatpush2.bf16.msra.mxu0 0
    %180 = vmatprep.subr.bf16.mxu0 0
    %181 = vmatpush2.bf16.msra.mxu0 0
    %182 = vmatprep.subr.bf16.mxu0 0
    %183 = vmatpush2.bf16.msra.mxu0 0
    %184 = vmatprep.subr.bf16.mxu0 0
    %185 = vmatpush2.bf16.msra.mxu0 0
    %186 = vmatprep.mubr.bf16.mxu0 0
    %187 = vmatmul.mubr.bf16.gmra.mxu0 %v99
    %v188 = vpop.f32.mrf.mxu0
    %v189 = vadd.f32 %v104, %v188
    %v190 = vpop.f32.mrf.mxu0
    %v191 = vpop.f32.mrf.mxu0
    %v192 = vpop.f32.mrf.mxu0
    %193 = vdwg.mxu0
    %v194 = vmax.f32 %v189, 0.0
    %v195 = vand.u32 2147483647, %v189
    %v196 = vsub.f32 0.0, %v195
    %v197 = vmul.f32 %v196, 1.442695
    %v198 = vpow.pop %v197
    %v199 = vadd.f32 %v198, 1.0
    %v200 = vlog2.pop %v199
    %v201 = vmul.f32 %v200, 0.6931472
    %v202 = vmul.f32 -0.5, %v198
    %v203 = vadd.f32 %v202, 1.0
    %v204 = vmul.f32 %v203, %v198
    %v205 = vand.u32 2147483647, %v198
    %vm206 = vcmp.lt.f32.partialorder %v205, 0.0004427343
    %v207 = vsel %vm206, %v204, %v201
    %v208 = vadd.f32 %v194, %v207
    %v209 = vld [vmem:[#allocation7] sm:$0xf]
    %v210 = vld [vmem:[#allocation7 + $0x4] sm:$0xf]
    %v211 = vld [vmem:[#allocation7 + $0x8] sm:$0xf]
    %v212 = vld [vmem:[#allocation7 + $0xc] sm:$0xf]
    %v213 = vld [vmem:[#allocation7 + $0x10] sm:$0xf]
    %v214 = vld [vmem:[#allocation7 + $0x14] sm:$0xf]
    %v215 = vld [vmem:[#allocation7 + $0x18] sm:$0xf]
    %v216 = vld [vmem:[#allocation7 + $0x1c] sm:$0xf]
    %v217 = vld [vmem:[#allocation7 + $0x20] sm:$0xf]
    %v218 = vld [vmem:[#allocation7 + $0x24] sm:$0xf]
    %v219 = vld [vmem:[#allocation7 + $0x28] sm:$0xf]
    %v220 = vld [vmem:[#allocation7 + $0x2c] sm:$0xf]
    %v221 = vld [vmem:[#allocation7 + $0x30] sm:$0xf]
    %v222 = vld [vmem:[#allocation7 + $0x34] sm:$0xf]
    %v223 = vld [vmem:[#allocation7 + $0x38] sm:$0xf]
    %v224 = vld [vmem:[#allocation7 + $0x3c] sm:$0xf]
    %v225 = vld [vmem:[%s4] sm:$0x1]
    %v226 = vpack.c.bf16 %v208, %v208
    %v228 = vlaneseq
    %v229 = vshrl.u32 %v228, 7
    %v230 = vsub.s32 0, %v229
    %v231 = vrot.slane %v225, %v230
    %v249 = vunpack.c.l.b16 %v209
    %v250 = vunpack.c.l.b16 %v210
    %v251 = vunpack.c.l.b16 %v211
    %v252 = vunpack.c.l.b16 %v212
    %v253 = vunpack.c.l.b16 %v213
    %v254 = vunpack.c.l.b16 %v214
    %v255 = vunpack.c.l.b16 %v215
    %v256 = vunpack.c.l.b16 %v216
    %v257 = vunpack.c.l.b16 %v217
    %v258 = vunpack.c.l.b16 %v218
    %v259 = vunpack.c.l.b16 %v219
    %v260 = vunpack.c.l.b16 %v220
    %v261 = vunpack.c.l.b16 %v221
    %v262 = vunpack.c.l.b16 %v222
    %v263 = vunpack.c.l.b16 %v223
    %v264 = vunpack.c.l.b16 %v224
    %v265 = vpack.c.b16 %v250, %v249
    %v266 = vpack.c.b16 %v252, %v251
    %v267 = vpack.c.b16 %v254, %v253
    %v268 = vpack.c.b16 %v256, %v255
    %v269 = vpack.c.b16 %v258, %v257
    %v270 = vpack.c.b16 %v260, %v259
    %v271 = vpack.c.b16 %v262, %v261
    %v272 = vpack.c.b16 %v264, %v263
    %281 = vmatprep.subr.bf16.mxu0 0
    %282 = vmatpush1.bf16.msra.mxu0 %v272
    %283 = vmatprep.subr.bf16.mxu0 0
    %284 = vmatpush1.bf16.msra.mxu0 %v271
    %285 = vmatprep.subr.bf16.mxu0 0
    %286 = vmatpush1.bf16.msra.mxu0 %v270
    %287 = vmatprep.subr.bf16.mxu0 0
    %288 = vmatpush1.bf16.msra.mxu0 %v269
    %289 = vmatprep.subr.bf16.mxu0 0
    %290 = vmatpush1.bf16.msra.mxu0 %v268
    %291 = vmatprep.subr.bf16.mxu0 0
    %292 = vmatpush1.bf16.msra.mxu0 %v267
    %293 = vmatprep.subr.bf16.mxu0 0
    %294 = vmatpush1.bf16.msra.mxu0 %v266
    %295 = vmatprep.subr.bf16.mxu0 0
    %296 = vmatpush1.bf16.msra.mxu0 %v265
    %297 = vmatprep.subr.bf16.mxu0 0
    %298 = vmatpush2.bf16.msra.mxu0 0
    %299 = vmatprep.subr.bf16.mxu0 0
    %300 = vmatpush2.bf16.msra.mxu0 0
    %301 = vmatprep.subr.bf16.mxu0 0
    %302 = vmatpush2.bf16.msra.mxu0 0
    %303 = vmatprep.subr.bf16.mxu0 0
    %304 = vmatpush2.bf16.msra.mxu0 0
    %305 = vmatprep.subr.bf16.mxu0 0
    %306 = vmatpush2.bf16.msra.mxu0 0
    %307 = vmatprep.subr.bf16.mxu0 0
    %308 = vmatpush2.bf16.msra.mxu0 0
    %309 = vmatprep.subr.bf16.mxu0 0
    %310 = vmatpush2.bf16.msra.mxu0 0
    %311 = vmatprep.subr.bf16.mxu0 0
    %312 = vmatpush2.bf16.msra.mxu0 0
    %313 = vmatprep.mubr.bf16.mxu0 0
    %314 = vmatmul.mubr.bf16.gmra.mxu0 %v226
    %v315 = vpop.f32.mrf.mxu0
    %v316 = vadd.f32 %v231, %v315
    %v317 = vpop.f32.mrf.mxu0
    %v318 = vpop.f32.mrf.mxu0
    %v319 = vpop.f32.mrf.mxu0
    %320 = vdwg.mxu0
    %v321 = vmax.f32 %v316, 0.0
    %v322 = vand.u32 2147483647, %v316
    %v323 = vsub.f32 0.0, %v322
    %v324 = vmul.f32 %v323, 1.442695
    %v325 = vpow.pop %v324
    %v326 = vadd.f32 %v325, 1.0
    %v327 = vlog2.pop %v326
    %v328 = vmul.f32 %v327, 0.6931472
    %v329 = vmul.f32 -0.5, %v325
    %v330 = vadd.f32 %v329, 1.0
    %v331 = vmul.f32 %v330, %v325
    %v332 = vand.u32 2147483647, %v325
    %vm333 = vcmp.lt.f32.partialorder %v332, 0.0004427343
    %v334 = vsel %vm333, %v331, %v328
    %v335 = vadd.f32 %v321, %v334
    %v336 = vld [vmem:[#allocation8] sm:$0xf]
    %v337 = vld [vmem:[#allocation8 + $0x4] sm:$0xf]
    %v338 = vld [vmem:[#allocation8 + $0x8] sm:$0xf]
    %v339 = vld [vmem:[#allocation8 + $0xc] sm:$0xf]
    %v340 = vld [vmem:[#allocation8 + $0x10] sm:$0xf]
    %v341 = vld [vmem:[#allocation8 + $0x14] sm:$0xf]
    %v342 = vld [vmem:[#allocation8 + $0x18] sm:$0xf]
    %v343 = vld [vmem:[#allocation8 + $0x1c] sm:$0xf]
    %v344 = vld [vmem:[#allocation8 + $0x20] sm:$0xf]
    %v345 = vld [vmem:[#allocation8 + $0x24] sm:$0xf]
    %v346 = vld [vmem:[#allocation8 + $0x28] sm:$0xf]
    %v347 = vld [vmem:[#allocation8 + $0x2c] sm:$0xf]
    %v348 = vld [vmem:[#allocation8 + $0x30] sm:$0xf]
    %v349 = vld [vmem:[#allocation8 + $0x34] sm:$0xf]
    %v350 = vld [vmem:[#allocation8 + $0x38] sm:$0xf]
    %v351 = vld [vmem:[#allocation8 + $0x3c] sm:$0xf]
    %v352 = vld [vmem:[%s6] sm:$0x1]
    %v353 = vpack.c.bf16 %v335, %v335
    %v355 = vlaneseq
    %v356 = vshrl.u32 %v355, 7
    %v357 = vsub.s32 0, %v356
    %v358 = vrot.slane %v352, %v357
    %v376 = vunpack.c.l.b16 %v336
    %v377 = vunpack.c.l.b16 %v337
    %v378 = vunpack.c.l.b16 %v338
    %v379 = vunpack.c.l.b16 %v339
    %v380 = vunpack.c.l.b16 %v340
    %v381 = vunpack.c.l.b16 %v341
    %v382 = vunpack.c.l.b16 %v342
    %v383 = vunpack.c.l.b16 %v343
    %v384 = vunpack.c.l.b16 %v344
    %v385 = vunpack.c.l.b16 %v345
    %v386 = vunpack.c.l.b16 %v346
    %v387 = vunpack.c.l.b16 %v347
    %v388 = vunpack.c.l.b16 %v348
    %v389 = vunpack.c.l.b16 %v349
    %v390 = vunpack.c.l.b16 %v350
    %v391 = vunpack.c.l.b16 %v351
    %v392 = vpack.c.b16 %v377, %v376
    %v393 = vpack.c.b16 %v379, %v378
    %v394 = vpack.c.b16 %v381, %v380
    %v395 = vpack.c.b16 %v383, %v382
    %v396 = vpack.c.b16 %v385, %v384
    %v397 = vpack.c.b16 %v387, %v386
    %v398 = vpack.c.b16 %v389, %v388
    %v399 = vpack.c.b16 %v391, %v390
    %408 = vmatprep.subr.bf16.mxu0 0
    %409 = vmatpush1.bf16.msra.mxu0 %v399
    %410 = vmatprep.subr.bf16.mxu0 0
    %411 = vmatpush1.bf16.msra.mxu0 %v398
    %412 = vmatprep.subr.bf16.mxu0 0
    %413 = vmatpush1.bf16.msra.mxu0 %v397
    %414 = vmatprep.subr.bf16.mxu0 0
    %415 = vmatpush1.bf16.msra.mxu0 %v396
    %416 = vmatprep.subr.bf16.mxu0 0
    %417 = vmatpush1.bf16.msra.mxu0 %v395
    %418 = vmatprep.subr.bf16.mxu0 0
    %419 = vmatpush1.bf16.msra.mxu0 %v394
    %420 = vmatprep.subr.bf16.mxu0 0
    %421 = vmatpush1.bf16.msra.mxu0 %v393
    %422 = vmatprep.subr.bf16.mxu0 0
    %423 = vmatpush1.bf16.msra.mxu0 %v392
    %424 = vmatprep.subr.bf16.mxu0 0
    %425 = vmatpush2.bf16.msra.mxu0 0
    %426 = vmatprep.subr.bf16.mxu0 0
    %427 = vmatpush2.bf16.msra.mxu0 0
    %428 = vmatprep.subr.bf16.mxu0 0
    %429 = vmatpush2.bf16.msra.mxu0 0
    %430 = vmatprep.subr.bf16.mxu0 0
    %431 = vmatpush2.bf16.msra.mxu0 0
    %432 = vmatprep.subr.bf16.mxu0 0
    %433 = vmatpush2.bf16.msra.mxu0 0
    %434 = vmatprep.subr.bf16.mxu0 0
    %435 = vmatpush2.bf16.msra.mxu0 0
    %436 = vmatprep.subr.bf16.mxu0 0
    %437 = vmatpush2.bf16.msra.mxu0 0
    %438 = vmatprep.subr.bf16.mxu0 0
    %439 = vmatpush2.bf16.msra.mxu0 0
    %440 = vmatprep.mubr.bf16.mxu0 0
    %441 = vmatmul.mubr.bf16.gmra.mxu0 %v353
    %v442 = vpop.f32.mrf.mxu0
    %v443 = vadd.f32 %v358, %v442
    %v444 = vpop.f32.mrf.mxu0
    %v445 = vpop.f32.mrf.mxu0
    %v446 = vpop.f32.mrf.mxu0
    %447 = vdwg.mxu0
    %v448 = vmax.f32 %v443, 0.0
    %v449 = vand.u32 2147483647, %v443
    %v450 = vsub.f32 0.0, %v449
    %v451 = vmul.f32 %v450, 1.442695
    %v452 = vpow.pop %v451
    %v453 = vadd.f32 %v452, 1.0
    %v454 = vlog2.pop %v453
    %v455 = vmul.f32 %v454, 0.6931472
    %v456 = vmul.f32 -0.5, %v452
    %v457 = vadd.f32 %v456, 1.0
    %v458 = vmul.f32 %v457, %v452
    %v459 = vand.u32 2147483647, %v452
    %vm460 = vcmp.lt.f32.partialorder %v459, 0.0004427343
    %v461 = vsel %vm460, %v458, %v455
    %v462 = vadd.f32 %v448, %v461
    %v463 = vmul.f32 %v462, 2.0
    %v464 = vsub.f32 %v463, 1.3862944
    %465 = vst [vmem:[#allocation10] sm:$0xff] %v464
    // Predicated region
    $region46: #{tpu_custom_call.1} parent=1 // pred_check
      _
    $region47: #{tpu_custom_call.1} parent=1 // pred_check_branch
      %467 = sbr.rel (0) target = $region49
    $region48: #{tpu_custom_call.1} parent=1 // pred_region
      %s469 = ssub.s32 128, 128
      %470 = vsyncadd [#allocation4], %s469
      %s472 = sshll.u32 [#allocation10], 4
      %s473 = int_to_ptr.vmem [resolvable:$true] %s472
      %475 = dma.vmem_to_hbm [thread:$0]  %s473, 128, %s7, [#allocation4]
    $region49: #{tpu_custom_call.1} parent=1 // pred_fallthru
      _
    // Predicated region
    $region50: #{tpu_custom_call.1} parent=1 // pred_check
      _
    $region51: #{tpu_custom_call.1} parent=1 // pred_check_branch
      %477 = sbr.rel (0) target = $region53
    $region52: #{tpu_custom_call.1} parent=1 // pred_region
      %478 = dma.done [#allocation4], 128
    $region53: #{tpu_custom_call.1} parent=1 // pred_fallthru
      _
    %479 = vsyncpa [#allocation3], 1
    %480 = vsyncpa [#allocation6], 1
    %481 = vsyncpa [#allocation9], 1
    %482 = vsyncpa [#allocation4], 1

// kernel: tpu_custom_call.1
$region0: #{tpu_custom_call.1}
  #allocation0 [shape = 'u32[]', space=smem, size = 0x4, offset = 0x4, fixed_abs, tag = 'smem constant byte address 0x4 - core index']
  #allocation1 [shape = 'u32[144,128]{1,0:T(1,128)}', space=vmem, size = 0x12000, scoped, tag = 'internal scratch']
  %s0 = inlined_call_operand.hbm [shape: f32[8,128], index: 0, kind: input, shape index: {}]
  %s1 = inlined_call_operand.hbm [shape: bf16[128,128], index: 1, kind: input, shape index: {}]
  %s2 = inlined_call_operand.vmem [shape: f32[1,128], index: 2, kind: input, shape index: {}]
  %s3 = inlined_call_operand.hbm [shape: bf16[128,128], index: 3, kind: input, shape index: {}]
  %s4 = inlined_call_operand.vmem [shape: f32[1,128], index: 4, kind: input, shape index: {}]
  %s5 = inlined_call_operand.hbm [shape: bf16[128,128], index: 5, kind: input, shape index: {}]
  %s6 = inlined_call_operand.vmem [shape: f32[1,128], index: 6, kind: input, shape index: {}]
  %s7 = inlined_call_operand.hbm [shape: f32[8,128], index: 7, kind: output, shape index: {}]
  %s8 = sld [smem:[#allocation0]]
  $region54: #{tpu_custom_call.1} parent=0
    _
  %s10 = ssub.s32 1, %s8
  %s11 = scalar_select 0, %s10, %s8
  $region1: #{tpu_custom_call.1} parent=0
    #allocation2 [shape = 'u8[4096]{0}', space=vmem, size = 0x1000, scoped, tag = 'input window, operand 0, single buffered']
    #allocation3 [shape = 's32[1]{0}', space=sflag, size = 0x4, scoped, tag = 'scoped memory for tpu_custom_call.1']
    #allocation4 [shape = 's32[1]{0}', space=sflag, size = 0x4, scoped, tag = 'scoped memory for tpu_custom_call.1']
    #allocation5 [shape = 'u8[32768]{0}', space=vmem, size = 0x8000, scoped, tag = 'input window, operand 1, single buffered']
    #allocation6 [shape = 's32[1]{0}', space=sflag, size = 0x4, scoped, tag = 'scoped memory for tpu_custom_call.1']
    #allocation7 [shape = 'u8[32768]{0}', space=vmem, size = 0x8000, scoped, tag = 'input window, operand 3, single buffered']
    #allocation8 [shape = 'u8[32768]{0}', space=vmem, size = 0x8000, scoped, tag = 'input window, operand 5, single buffered']
    #allocation9 [shape = 's32[1]{0}', space=sflag, size = 0x4, scoped, tag = 'scoped memory for tpu_custom_call.1']
    #allocation10 [shape = 'u8[4096]{0}', space=vmem, size = 0x1000, scoped, tag = 'output window, operand 0, single buffered']
    %12 = vsyncpa [#allocation3], 0
    %13 = vsyncpa [#allocation6], 0
    %14 = vsyncpa [#allocation9], 0
    %15 = vsyncpa [#allocation4], 0
    // Predicated region
    $region2: #{tpu_custom_call.1} parent=1 // pred_check
      _
    $region3: #{tpu_custom_call.1} parent=1 // pred_check_branch
      %17 = sbr.rel (0) target = $region5
    $region4: #{tpu_custom_call.1} parent=1 // pred_region
      %s19 = ssub.s32 128, 128
      %20 = vsyncadd [#allocation3], %s19
      %s22 = sshll.u32 [#allocation2], 4
      %s23 = int_to_ptr.vmem [resolvable:$true] %s22
      %25 = dma.hbm_to_vmem [thread:$0]  %s0, 128, %s23, [#allocation3]
    $region5: #{tpu_custom_call.1} parent=1 // pred_fallthru
      _
    // Predicated region
    $region6: #{tpu_custom_call.1} parent=1 // pred_check
      _
    $region7: #{tpu_custom_call.1} parent=1 // pred_check_branch
      %27 = sbr.rel (0) target = $region9
    $region8: #{tpu_custom_call.1} parent=1 // pred_region
      %s29 = ssub.s32 1024, 1024
      %30 = vsyncadd [#allocation6], %s29
      %s31 = sshll.u32 [#allocation5], 4
      %s32 = int_to_ptr.vmem [resolvable:$true] %s31
      %37 = dma.hbm_to_vmem [thread:$0]  %s1, 1024, %s32, [#allocation6], 64, 64, 4
    $region9: #{tpu_custom_call.1} parent=1 // pred_fallthru
      _
    // Predicated region
    $region10: #{tpu_custom_call.1} parent=1 // pred_check
      _
    $region11: #{tpu_custom_call.1} parent=1 // pred_check_branch
      %39 = sbr.rel (0) target = $region13
    $region12: #{tpu_custom_call.1} parent=1 // pred_region
      _
    $region13: #{tpu_custom_call.1} parent=1 // pred_fallthru
      _
    // Predicated region
    $region14: #{tpu_custom_call.1} parent=1 // pred_check
      _
    $region15: #{tpu_custom_call.1} parent=1 // pred_check_branch
      %41 = sbr.rel (0) target = $region17
    $region16: #{tpu_custom_call.1} parent=1 // pred_region
      %s43 = ssub.s32 1024, 1024
      %44 = vsyncadd [#allocation6], %s43
      %s45 = sshll.u32 [#allocation7], 4
      %s46 = int_to_ptr.vmem [resolvable:$true] %s45
      %51 = dma.hbm_to_vmem [thread:$0]  %s3, 1024, %s46, [#allocation6], 64, 64, 4
    $region17: #{tpu_custom_call.1} parent=1 // pred_fallthru
      _
    // Predicated region
    $region18: #{tpu_custom_call.1} parent=1 // pred_check
      _
    $region19: #{tpu_custom_call.1} parent=1 // pred_check_branch
      %53 = sbr.rel (0) target = $region21
    $region20: #{tpu_custom_call.1} parent=1 // pred_region
      _
    $region21: #{tpu_custom_call.1} parent=1 // pred_fallthru
      _
    // Predicated region
    $region22: #{tpu_custom_call.1} parent=1 // pred_check
      _
    $region23: #{tpu_custom_call.1} parent=1 // pred_check_branch
      %55 = sbr.rel (0) target = $region25
    $region24: #{tpu_custom_call.1} parent=1 // pred_region
      %s57 = ssub.s32 1024, 1024
      %58 = vsyncadd [#allocation9], %s57
      %s59 = sshll.u32 [#allocation8], 4
      %s60 = int_to_ptr.vmem [resolvable:$true] %s59
      %65 = dma.hbm_to_vmem [thread:$0]  %s5, 1024, %s60, [#allocation9], 64, 64, 4
    $region25: #{tpu_custom_call.1} parent=1 // pred_fallthru
      _
    // Predicated region
    $region26: #{tpu_custom_call.1} parent=1 // pred_check
      _
    $region27: #{tpu_custom_call.1} parent=1 // pred_check_branch
      %67 = sbr.rel (0) target = $region29
    $region28: #{tpu_custom_call.1} parent=1 // pred_region
      _
    $region29: #{tpu_custom_call.1} parent=1 // pred_fallthru
      _
    // Predicated region
    $region30: #{tpu_custom_call.1} parent=1 // pred_check
      _
    $region31: #{tpu_custom_call.1} parent=1 // pred_check_branch
      %69 = sbr.rel (0) target = $region33
    $region32: #{tpu_custom_call.1} parent=1 // pred_region
      %70 = dma.done [#allocation3], 128
    $region33: #{tpu_custom_call.1} parent=1 // pred_fallthru
      _
    // Predicated region
    $region34: #{tpu_custom_call.1} parent=1 // pred_check
      _
    $region35: #{tpu_custom_call.1} parent=1 // pred_check_branch
      %72 = sbr.rel (0) target = $region37
    $region36: #{tpu_custom_call.1} parent=1 // pred_region
      %73 = dma.done [#allocation6], 1024
    $region37: #{tpu_custom_call.1} parent=1 // pred_fallthru
      _
    // Predicated region
    $region38: #{tpu_custom_call.1} parent=1 // pred_check
      _
    $region39: #{tpu_custom_call.1} parent=1 // pred_check_branch
      %75 = sbr.rel (0) target = $region41
    $region40: #{tpu_custom_call.1} parent=1 // pred_region
      %76 = dma.done [#allocation6], 1024
    $region41: #{tpu_custom_call.1} parent=1 // pred_fallthru
      _
    // Predicated region
    $region42: #{tpu_custom_call.1} parent=1 // pred_check
      _
    $region43: #{tpu_custom_call.1} parent=1 // pred_check_branch
      %78 = sbr.rel (0) target = $region45
    $region44: #{tpu_custom_call.1} parent=1 // pred_region
      %79 = dma.done [#allocation9], 1024
    $region45: #{tpu_custom_call.1} parent=1 // pred_fallthru
      _
    %v81 = vld [vmem:[#allocation2] sm:$0xff]
    %v82 = vld [vmem:[#allocation5] sm:$0xf]
    %v83 = vld [vmem:[#allocation5 + $0x4] sm:$0xf]
    %v84 = vld [vmem:[#allocation5 + $0x8] sm:$0xf]
    %v85 = vld [vmem:[#allocation5 + $0xc] sm:$0xf]
    %v86 = vld [vmem:[#allocation5 + $0x10] sm:$0xf]
    %v87 = vld [vmem:[#allocation5 + $0x14] sm:$0xf]
    %v88 = vld [vmem:[#allocation5 + $0x18] sm:$0xf]
    %v89 = vld [vmem:[#allocation5 + $0x1c] sm:$0xf]
    %v90 = vld [vmem:[#allocation5 + $0x20] sm:$0xf]
    %v91 = vld [vmem:[#allocation5 + $0x24] sm:$0xf]
    %v92 = vld [vmem:[#allocation5 + $0x28] sm:$0xf]
    %v93 = vld [vmem:[#allocation5 + $0x2c] sm:$0xf]
    %v94 = vld [vmem:[#allocation5 + $0x30] sm:$0xf]
    %v95 = vld [vmem:[#allocation5 + $0x34] sm:$0xf]
    %v96 = vld [vmem:[#allocation5 + $0x38] sm:$0xf]
    %v97 = vld [vmem:[#allocation5 + $0x3c] sm:$0xf]
    %v98 = vld [vmem:[%s2] sm:$0x1]
    %v99 = vpack.c.bf16 %v81, %v81
    %v101 = vlaneseq
    %v102 = vshrl.u32 %v101, 7
    %v103 = vsub.s32 0, %v102
    %v104 = vrot.slane %v98, %v103
    %v122 = vunpack.c.l.b16 %v82
    %v123 = vunpack.c.l.b16 %v83
    %v124 = vunpack.c.l.b16 %v84
    %v125 = vunpack.c.l.b16 %v85
    %v126 = vunpack.c.l.b16 %v86
    %v127 = vunpack.c.l.b16 %v87
    %v128 = vunpack.c.l.b16 %v88
    %v129 = vunpack.c.l.b16 %v89
    %v130 = vunpack.c.l.b16 %v90
    %v131 = vunpack.c.l.b16 %v91
    %v132 = vunpack.c.l.b16 %v92
    %v133 = vunpack.c.l.b16 %v93
    %v134 = vunpack.c.l.b16 %v94
    %v135 = vunpack.c.l.b16 %v95
    %v136 = vunpack.c.l.b16 %v96
    %v137 = vunpack.c.l.b16 %v97
    %v138 = vpack.c.b16 %v123, %v122
    %v139 = vpack.c.b16 %v125, %v124
    %v140 = vpack.c.b16 %v127, %v126
    %v141 = vpack.c.b16 %v129, %v128
    %v142 = vpack.c.b16 %v131, %v130
    %v143 = vpack.c.b16 %v133, %v132
    %v144 = vpack.c.b16 %v135, %v134
    %v145 = vpack.c.b16 %v137, %v136
    %154 = vmatprep.subr.bf16.mxu0 0
    %155 = vmatpush1.bf16.msra.mxu0 %v145
    %156 = vmatprep.subr.bf16.mxu0 0
    %157 = vmatpush1.bf16.msra.mxu0 %v144
    %158 = vmatprep.subr.bf16.mxu0 0
    %159 = vmatpush1.bf16.msra.mxu0 %v143
    %160 = vmatprep.subr.bf16.mxu0 0
    %161 = vmatpush1.bf16.msra.mxu0 %v142
    %162 = vmatprep.subr.bf16.mxu0 0
    %163 = vmatpush1.bf16.msra.mxu0 %v141
    %164 = vmatprep.subr.bf16.mxu0 0
    %165 = vmatpush1.bf16.msra.mxu0 %v140
    %166 = vmatprep.subr.bf16.mxu0 0
    %167 = vmatpush1.bf16.msra.mxu0 %v139
    %168 = vmatprep.subr.bf16.mxu0 0
    %169 = vmatpush1.bf16.msra.mxu0 %v138
    %170 = vmatprep.subr.bf16.mxu0 0
    %171 = vmatpush2.bf16.msra.mxu0 0
    %172 = vmatprep.subr.bf16.mxu0 0
    %173 = vmatpush2.bf16.msra.mxu0 0
    %174 = vmatprep.subr.bf16.mxu0 0
    %175 = vmatpush2.bf16.msra.mxu0 0
    %176 = vmatprep.subr.bf16.mxu0 0
    %177 = vmatpush2.bf16.msra.mxu0 0
    %178 = vmatprep.subr.bf16.mxu0 0
    %179 = vmatpush2.bf16.msra.mxu0 0
    %180 = vmatprep.subr.bf16.mxu0 0
    %181 = vmatpush2.bf16.msra.mxu0 0
    %182 = vmatprep.subr.bf16.mxu0 0
    %183 = vmatpush2.bf16.msra.mxu0 0
    %184 = vmatprep.subr.bf16.mxu0 0
    %185 = vmatpush2.bf16.msra.mxu0 0
    %186 = vmatprep.mubr.bf16.mxu0 0
    %187 = vmatmul.mubr.bf16.gmra.mxu0 %v99
    %v188 = vpop.f32.mrf.mxu0
    %v189 = vadd.f32 %v104, %v188
    %v190 = vpop.f32.mrf.mxu0
    %v191 = vpop.f32.mrf.mxu0
    %v192 = vpop.f32.mrf.mxu0
    %193 = vdwg.mxu0
    %v194 = vmax.f32 %v189, 0.0
    %v195 = vand.u32 2147483647, %v189
    %v196 = vsub.f32 0.0, %v195
    %v197 = vmul.f32 %v196, 1.442695
    %v198 = vpow.pop %v197
    %v199 = vadd.f32 %v198, 1.0
    %v200 = vlog2.pop %v199
    %v201 = vmul.f32 %v200, 0.6931472
    %v202 = vmul.f32 -0.5, %v198
    %v203 = vadd.f32 %v202, 1.0
    %v204 = vmul.f32 %v203, %v198
    %v205 = vand.u32 2147483647, %v198
    %vm206 = vcmp.lt.f32.partialorder %v205, 0.0004427343
    %v207 = vsel %vm206, %v204, %v201
    %v208 = vadd.f32 %v194, %v207
    %v209 = vld [vmem:[#allocation7] sm:$0xf]
    %v210 = vld [vmem:[#allocation7 + $0x4] sm:$0xf]
    %v211 = vld [vmem:[#allocation7 + $0x8] sm:$0xf]
    %v212 = vld [vmem:[#allocation7 + $0xc] sm:$0xf]
    %v213 = vld [vmem:[#allocation7 + $0x10] sm:$0xf]
    %v214 = vld [vmem:[#allocation7 + $0x14] sm:$0xf]
    %v215 = vld [vmem:[#allocation7 + $0x18] sm:$0xf]
    %v216 = vld [vmem:[#allocation7 + $0x1c] sm:$0xf]
    %v217 = vld [vmem:[#allocation7 + $0x20] sm:$0xf]
    %v218 = vld [vmem:[#allocation7 + $0x24] sm:$0xf]
    %v219 = vld [vmem:[#allocation7 + $0x28] sm:$0xf]
    %v220 = vld [vmem:[#allocation7 + $0x2c] sm:$0xf]
    %v221 = vld [vmem:[#allocation7 + $0x30] sm:$0xf]
    %v222 = vld [vmem:[#allocation7 + $0x34] sm:$0xf]
    %v223 = vld [vmem:[#allocation7 + $0x38] sm:$0xf]
    %v224 = vld [vmem:[#allocation7 + $0x3c] sm:$0xf]
    %v225 = vld [vmem:[%s4] sm:$0x1]
    %v226 = vpack.c.bf16 %v208, %v208
    %v228 = vlaneseq
    %v229 = vshrl.u32 %v228, 7
    %v230 = vsub.s32 0, %v229
    %v231 = vrot.slane %v225, %v230
    %v249 = vunpack.c.l.b16 %v209
    %v250 = vunpack.c.l.b16 %v210
    %v251 = vunpack.c.l.b16 %v211
    %v252 = vunpack.c.l.b16 %v212
    %v253 = vunpack.c.l.b16 %v213
    %v254 = vunpack.c.l.b16 %v214
    %v255 = vunpack.c.l.b16 %v215
    %v256 = vunpack.c.l.b16 %v216
    %v257 = vunpack.c.l.b16 %v217
    %v258 = vunpack.c.l.b16 %v218
    %v259 = vunpack.c.l.b16 %v219
    %v260 = vunpack.c.l.b16 %v220
    %v261 = vunpack.c.l.b16 %v221
    %v262 = vunpack.c.l.b16 %v222
    %v263 = vunpack.c.l.b16 %v223
    %v264 = vunpack.c.l.b16 %v224
    %v265 = vpack.c.b16 %v250, %v249
    %v266 = vpack.c.b16 %v252, %v251
    %v267 = vpack.c.b16 %v254, %v253
    %v268 = vpack.c.b16 %v256, %v255
    %v269 = vpack.c.b16 %v258, %v257
    %v270 = vpack.c.b16 %v260, %v259
    %v271 = vpack.c.b16 %v262, %v261
    %v272 = vpack.c.b16 %v264, %v263
    %281 = vmatprep.subr.bf16.mxu0 0
    %282 = vmatpush1.bf16.msra.mxu0 %v272
    %283 = vmatprep.subr.bf16.mxu0 0
    %284 = vmatpush1.bf16.msra.mxu0 %v271
    %285 = vmatprep.subr.bf16.mxu0 0
    %286 = vmatpush1.bf16.msra.mxu0 %v270
    %287 = vmatprep.subr.bf16.mxu0 0
    %288 = vmatpush1.bf16.msra.mxu0 %v269
    %289 = vmatprep.subr.bf16.mxu0 0
    %290 = vmatpush1.bf16.msra.mxu0 %v268
    %291 = vmatprep.subr.bf16.mxu0 0
    %292 = vmatpush1.bf16.msra.mxu0 %v267
    %293 = vmatprep.subr.bf16.mxu0 0
    %294 = vmatpush1.bf16.msra.mxu0 %v266
    %295 = vmatprep.subr.bf16.mxu0 0
    %296 = vmatpush1.bf16.msra.mxu0 %v265
    %297 = vmatprep.subr.bf16.mxu0 0
    %298 = vmatpush2.bf16.msra.mxu0 0
    %299 = vmatprep.subr.bf16.mxu0 0
    %300 = vmatpush2.bf16.msra.mxu0 0
    %301 = vmatprep.subr.bf16.mxu0 0
    %302 = vmatpush2.bf16.msra.mxu0 0
    %303 = vmatprep.subr.bf16.mxu0 0
    %304 = vmatpush2.bf16.msra.mxu0 0
    %305 = vmatprep.subr.bf16.mxu0 0
    %306 = vmatpush2.bf16.msra.mxu0 0
    %307 = vmatprep.subr.bf16.mxu0 0
    %308 = vmatpush2.bf16.msra.mxu0 0
    %309 = vmatprep.subr.bf16.mxu0 0
    %310 = vmatpush2.bf16.msra.mxu0 0
    %311 = vmatprep.subr.bf16.mxu0 0
    %312 = vmatpush2.bf16.msra.mxu0 0
    %313 = vmatprep.mubr.bf16.mxu0 0
    %314 = vmatmul.mubr.bf16.gmra.mxu0 %v226
    %v315 = vpop.f32.mrf.mxu0
    %v316 = vadd.f32 %v231, %v315
    %v317 = vpop.f32.mrf.mxu0
    %v318 = vpop.f32.mrf.mxu0
    %v319 = vpop.f32.mrf.mxu0
    %320 = vdwg.mxu0
    %v321 = vmax.f32 %v316, 0.0
    %v322 = vand.u32 2147483647, %v316
    %v323 = vsub.f32 0.0, %v322
    %v324 = vmul.f32 %v323, 1.442695
    %v325 = vpow.pop %v324
    %v326 = vadd.f32 %v325, 1.0
    %v327 = vlog2.pop %v326
    %v328 = vmul.f32 %v327, 0.6931472
    %v329 = vmul.f32 -0.5, %v325
    %v330 = vadd.f32 %v329, 1.0
    %v331 = vmul.f32 %v330, %v325
    %v332 = vand.u32 2147483647, %v325
    %vm333 = vcmp.lt.f32.partialorder %v332, 0.0004427343
    %v334 = vsel %vm333, %v331, %v328
    %v335 = vadd.f32 %v321, %v334
    %v336 = vld [vmem:[#allocation8] sm:$0xf]
    %v337 = vld [vmem:[#allocation8 + $0x4] sm:$0xf]
    %v338 = vld [vmem:[#allocation8 + $0x8] sm:$0xf]
    %v339 = vld [vmem:[#allocation8 + $0xc] sm:$0xf]
    %v340 = vld [vmem:[#allocation8 + $0x10] sm:$0xf]
    %v341 = vld [vmem:[#allocation8 + $0x14] sm:$0xf]
    %v342 = vld [vmem:[#allocation8 + $0x18] sm:$0xf]
    %v343 = vld [vmem:[#allocation8 + $0x1c] sm:$0xf]
    %v344 = vld [vmem:[#allocation8 + $0x20] sm:$0xf]
    %v345 = vld [vmem:[#allocation8 + $0x24] sm:$0xf]
    %v346 = vld [vmem:[#allocation8 + $0x28] sm:$0xf]
    %v347 = vld [vmem:[#allocation8 + $0x2c] sm:$0xf]
    %v348 = vld [vmem:[#allocation8 + $0x30] sm:$0xf]
    %v349 = vld [vmem:[#allocation8 + $0x34] sm:$0xf]
    %v350 = vld [vmem:[#allocation8 + $0x38] sm:$0xf]
    %v351 = vld [vmem:[#allocation8 + $0x3c] sm:$0xf]
    %v352 = vld [vmem:[%s6] sm:$0x1]
    %v353 = vpack.c.bf16 %v335, %v335
    %v355 = vlaneseq
    %v356 = vshrl.u32 %v355, 7
    %v357 = vsub.s32 0, %v356
    %v358 = vrot.slane %v352, %v357
    %v376 = vunpack.c.l.b16 %v336
    %v377 = vunpack.c.l.b16 %v337
    %v378 = vunpack.c.l.b16 %v338
    %v379 = vunpack.c.l.b16 %v339
    %v380 = vunpack.c.l.b16 %v340
    %v381 = vunpack.c.l.b16 %v341
    %v382 = vunpack.c.l.b16 %v342
    %v383 = vunpack.c.l.b16 %v343
    %v384 = vunpack.c.l.b16 %v344
    %v385 = vunpack.c.l.b16 %v345
    %v386 = vunpack.c.l.b16 %v346
    %v387 = vunpack.c.l.b16 %v347
    %v388 = vunpack.c.l.b16 %v348
    %v389 = vunpack.c.l.b16 %v349
    %v390 = vunpack.c.l.b16 %v350
    %v391 = vunpack.c.l.b16 %v351
    %v392 = vpack.c.b16 %v377, %v376
    %v393 = vpack.c.b16 %v379, %v378
    %v394 = vpack.c.b16 %v381, %v380
    %v395 = vpack.c.b16 %v383, %v382
    %v396 = vpack.c.b16 %v385, %v384
    %v397 = vpack.c.b16 %v387, %v386
    %v398 = vpack.c.b16 %v389, %v388
    %v399 = vpack.c.b16 %v391, %v390
    %408 = vmatprep.subr.bf16.mxu0 0
    %409 = vmatpush1.bf16.msra.mxu0 %v399
    %410 = vmatprep.subr.bf16.mxu0 0
    %411 = vmatpush1.bf16.msra.mxu0 %v398
    %412 = vmatprep.subr.bf16.mxu0 0
    %413 = vmatpush1.bf16.msra.mxu0 %v397
    %414 = vmatprep.subr.bf16.mxu0 0
    %415 = vmatpush1.bf16.msra.mxu0 %v396
    %416 = vmatprep.subr.bf16.mxu0 0
    %417 = vmatpush1.bf16.msra.mxu0 %v395
    %418 = vmatprep.subr.bf16.mxu0 0
    %419 = vmatpush1.bf16.msra.mxu0 %v394
    %420 = vmatprep.subr.bf16.mxu0 0
    %421 = vmatpush1.bf16.msra.mxu0 %v393
    %422 = vmatprep.subr.bf16.mxu0 0
    %423 = vmatpush1.bf16.msra.mxu0 %v392
    %424 = vmatprep.subr.bf16.mxu0 0
    %425 = vmatpush2.bf16.msra.mxu0 0
    %426 = vmatprep.subr.bf16.mxu0 0
    %427 = vmatpush2.bf16.msra.mxu0 0
    %428 = vmatprep.subr.bf16.mxu0 0
    %429 = vmatpush2.bf16.msra.mxu0 0
    %430 = vmatprep.subr.bf16.mxu0 0
    %431 = vmatpush2.bf16.msra.mxu0 0
    %432 = vmatprep.subr.bf16.mxu0 0
    %433 = vmatpush2.bf16.msra.mxu0 0
    %434 = vmatprep.subr.bf16.mxu0 0
    %435 = vmatpush2.bf16.msra.mxu0 0
    %436 = vmatprep.subr.bf16.mxu0 0
    %437 = vmatpush2.bf16.msra.mxu0 0
    %438 = vmatprep.subr.bf16.mxu0 0
    %439 = vmatpush2.bf16.msra.mxu0 0
    %440 = vmatprep.mubr.bf16.mxu0 0
    %441 = vmatmul.mubr.bf16.gmra.mxu0 %v353
    %v442 = vpop.f32.mrf.mxu0
    %v443 = vadd.f32 %v358, %v442
    %v444 = vpop.f32.mrf.mxu0
    %v445 = vpop.f32.mrf.mxu0
    %v446 = vpop.f32.mrf.mxu0
    %447 = vdwg.mxu0
    %v448 = vmax.f32 %v443, 0.0
    %v449 = vand.u32 2147483647, %v443
    %v450 = vsub.f32 0.0, %v449
    %v451 = vmul.f32 %v450, 1.442695
    %v452 = vpow.pop %v451
    %v453 = vadd.f32 %v452, 1.0
    %v454 = vlog2.pop %v453
    %v455 = vmul.f32 %v454, 0.6931472
    %v456 = vmul.f32 -0.5, %v452
    %v457 = vadd.f32 %v456, 1.0
    %v458 = vmul.f32 %v457, %v452
    %v459 = vand.u32 2147483647, %v452
    %vm460 = vcmp.lt.f32.partialorder %v459, 0.0004427343
    %v461 = vsel %vm460, %v458, %v455
    %v462 = vadd.f32 %v448, %v461
    %v463 = vmul.f32 %v462, 2.0
    %v464 = vsub.f32 %v463, 1.3862944
    %465 = vst [vmem:[#allocation10] sm:$0xff] %v464
    // Predicated region
    $region46: #{tpu_custom_call.1} parent=1 // pred_check
      _
    $region47: #{tpu_custom_call.1} parent=1 // pred_check_branch
      %467 = sbr.rel (0) target = $region49
    $region48: #{tpu_custom_call.1} parent=1 // pred_region
      %s469 = ssub.s32 128, 128
      %470 = vsyncadd [#allocation4], %s469
      %s472 = sshll.u32 [#allocation10], 4
      %s473 = int_to_ptr.vmem [resolvable:$true] %s472
      %475 = dma.vmem_to_hbm [thread:$0]  %s473, 128, %s7, [#allocation4]
    $region49: #{tpu_custom_call.1} parent=1 // pred_fallthru
      _
    // Predicated region
    $region50: #{tpu_custom_call.1} parent=1 // pred_check
      _
    $region51: #{tpu_custom_call.1} parent=1 // pred_check_branch
      %477 = sbr.rel (0) target = $region53
    $region52: #{tpu_custom_call.1} parent=1 // pred_region
      %478 = dma.done [#allocation4], 128
    $region53: #{tpu_custom_call.1} parent=1 // pred_fallthru
      _
    %479 = vsyncpa [#allocation3], 1
    %480 = vsyncpa [#allocation6], 1
    %481 = vsyncpa [#allocation9], 1
    %482 = vsyncpa [#allocation4], 1

</llo_original>
